<compile_context>
chip_gen: v7x
topology: tpu7x:2x2x1
jax: 0.10.0
libtpu: 0.0.40
codegen_flags: <defaults>
</compile_context>

<pallas_src>
import jax
import jax.numpy as jnp
from jax.experimental import pallas as pl
from jax.experimental.pallas import tpu as pltpu


def iou_kernel(x_ref, o_ref):
    # Elementwise hot path on the VPU: (x > 0) -> float32.
    o_ref[...] = (x_ref[...] > 0).astype(jnp.float32)


def iou_forward(mask_ious: jax.Array) -> jax.Array:
    """Equivalent of IoU.forward({'mask_ious': mask_ious}) -> (N, M) float32."""
    B, N, M = mask_ious.shape

    # Row tile: multiple of 8 (sublane) or the full dim; keeps per-block
    # bytes small enough for the tightest (v5e 16 MiB) scoped-VMEM default.
    TN = N if N <= 512 else 512
    # Lane tile: multiple of 128 (lane) or the full dim; keeps stores
    # unmasked (lane-dense) and DMA transfers long and contiguous.
    TM = M if M <= 2048 else 2048

    grid = (pl.cdiv(N, TN), pl.cdiv(M, TM))

    in_bytes = jnp.dtype(mask_ious.dtype).itemsize
    cost = pl.CostEstimate(
        flops=N * M,
        transcendentals=0,
        bytes_accessed=N * M * (in_bytes + 4),
    )

    return pl.pallas_call(
        iou_kernel,
        out_shape=jax.ShapeDtypeStruct((N, M), jnp.float32),
        grid=grid,
        # Squeeze the batch dim: block index 0 along B selects mask_ious[0];
        # the kernel Ref is (TN, TM).
        in_specs=[pl.BlockSpec((None, TN, TM), lambda i, j: (0, i, j))],
        out_specs=pl.BlockSpec((TN, TM), lambda i, j: (i, j)),
        compiler_params=pltpu.CompilerParams(
            dimension_semantics=("parallel", "parallel"),
        ),
        cost_estimate=cost,
    )(mask_ious)


if __name__ == "__main__":
    # The IoU module has no parameters (its __init__ creates nothing),
    # so there is nothing to initialize beyond the input tensor.
    key = jax.random.PRNGKey(0)
    # Small, tile-friendly shape: batch of 2 IoU matrices of shape (16, 256).
    mask_ious = jax.random.normal(key, (2, 16, 256), dtype=jnp.float32)

    out = iou_forward(mask_ious)
    out = jax.block_until_ready(out)

    # Reference check against plain JAX semantics of the PyTorch forward.
    ref = (mask_ious[0] > 0).astype(jnp.float32)
    assert out.shape == ref.shape and out.dtype == ref.dtype
    assert bool(jnp.all(out == ref))

    print("KERNEL_OK")
</pallas_src>

<mosaic_0001>
module attributes {stable_mosaic.version = 11 : i64} {
  func.func @iou_kernel(%arg0: i32, %arg1: i32, %arg2: memref<1x16x256xf32, #tpu.memory_space<vmem>>, %arg3: memref<16x256xf32, #tpu.memory_space<vmem>>) attributes {dimension_semantics = [#tpu.dimension_semantics<parallel>, #tpu.dimension_semantics<parallel>], iteration_bounds = array<i64: 1, 1>, scalar_prefetch = 0 : i64, scratch_operands = 0 : i64, tpu.core_type = #tpu.core_type<tc>, window_params = [{transform_indices = @transform_0, window_bounds = array<i64: 1, 16, 256>}, {transform_indices = @transform_1, window_bounds = array<i64: 16, 256>}]} {
    %c0 = arith.constant 0 : index
    %c0_0 = arith.constant 0 : index
    %c0_1 = arith.constant 0 : index
    %0 = vector.load %arg2[%c0, %c0_0, %c0_1] : memref<1x16x256xf32, #tpu.memory_space<vmem>>, vector<1x16x256xf32>
    %1 = vector.shape_cast %0 : vector<1x16x256xf32> to vector<16x256xf32>
    %cst = arith.constant 0.000000e+00 : f32
    %2 = vector.broadcast %cst : f32 to vector<16x256xf32>
    %3 = arith.cmpf ogt, %1, %2 : vector<16x256xf32>
    %4 = arith.extui %3 : vector<16x256xi1> to vector<16x256xi32>
    %5 = arith.sitofp %4 : vector<16x256xi32> to vector<16x256xf32>
    %c0_2 = arith.constant 0 : index
    %c0_3 = arith.constant 0 : index
    %6 = vector.load %arg3[%c0_2, %c0_3] : memref<16x256xf32, #tpu.memory_space<vmem>>, vector<16x256xf32>
    tpu.vector_store %arg3[%c0_2, %c0_3], %5 {strides = array<i32>} : memref<16x256xf32, #tpu.memory_space<vmem>>, vector<16x256xf32>,
    return
  }
  func.func @transform_0(%arg0: i32, %arg1: i32) -> (i32, i32, i32) {
    %c0_i32 = arith.constant 0 : i32
    %c0_i32_0 = arith.constant 0 : i32
    return %c0_i32, %arg0, %arg1 : i32, i32, i32
  }
  func.func @transform_1(%arg0: i32, %arg1: i32) -> (i32, i32) {
    %c0_i32 = arith.constant 0 : i32
    return %arg0, %arg1 : i32, i32
  }
}

</mosaic_0001>

<llo_original>
// kernel: tpu_custom_call.1
$region0: #{tpu_custom_call.1}
  #allocation0 [shape = 'u32[]', space=smem, size = 0x4, offset = 0x4, fixed_abs, tag = 'smem constant byte address 0x4 - core index']
  #allocation1 [shape = 'u32[144,128]{1,0:T(1,128)}', space=vmem, size = 0x12000, scoped, tag = 'internal scratch']
  %s0 = inlined_call_operand.hbm [shape: f32[2,16,256], index: 0, kind: input, shape index: {}]
  %s1 = inlined_call_operand.hbm [shape: f32[16,256], index: 1, kind: output, shape index: {}]
  %s2 = sld [smem:[#allocation0]]
  $region18: #{tpu_custom_call.1} parent=0
    _
  %s4 = ssub.s32 1, %s2
  %s5 = scalar_select 0, %s4, %s2
  $region1: #{tpu_custom_call.1} parent=0
    #allocation2 [shape = 'u8[16384]{0}', space=vmem, size = 0x4000, scoped, tag = 'input window, operand 0, single buffered']
    #allocation3 [shape = 's32[1]{0}', space=sflag, size = 0x4, scoped, tag = 'scoped memory for tpu_custom_call.1']
    #allocation4 [shape = 's32[1]{0}', space=sflag, size = 0x4, scoped, tag = 'scoped memory for tpu_custom_call.1']
    #allocation5 [shape = 'u8[16384]{0}', space=vmem, size = 0x4000, scoped, tag = 'output window, operand 0, single buffered']
    %6 = vsyncpa [#allocation3], 0
    %7 = vsyncpa [#allocation4], 0
    // Predicated region
    $region2: #{tpu_custom_call.1} parent=1 // pred_check
      _
    $region3: #{tpu_custom_call.1} parent=1 // pred_check_branch
      %9 = sbr.rel (0) target = $region5
    $region4: #{tpu_custom_call.1} parent=1 // pred_region
      %s11 = ssub.s32 512, 512
      %12 = vsyncadd [#allocation3], %s11
      %s13 = sshll.u32 [#allocation2], 4
      %s14 = int_to_ptr.vmem [resolvable:$true] %s13
      %19 = dma.hbm_to_vmem [thread:$0]  %s0, 512, %s14, [#allocation3], 256, 256, 16
    $region5: #{tpu_custom_call.1} parent=1 // pred_fallthru
      _
    // Predicated region
    $region6: #{tpu_custom_call.1} parent=1 // pred_check
      _
    $region7: #{tpu_custom_call.1} parent=1 // pred_check_branch
      %21 = sbr.rel (0) target = $region9
    $region8: #{tpu_custom_call.1} parent=1 // pred_region
      %22 = dma.done [#allocation3], 512
    $region9: #{tpu_custom_call.1} parent=1 // pred_fallthru
      _
    %v23 = vld [vmem:[#allocation2] sm:$0xff]
    %v24 = vld [vmem:[#allocation2 + $0x8] sm:$0xff]
    %v25 = vld [vmem:[#allocation2 + $0x10] sm:$0xff]
    %v26 = vld [vmem:[#allocation2 + $0x18] sm:$0xff]
    %vm27 = vcmp.gt.f32.partialorder %v23, 0.0
    %vm28 = vcmp.gt.f32.partialorder %v24, 0.0
    %vm29 = vcmp.gt.f32.partialorder %v25, 0.0
    %vm30 = vcmp.gt.f32.partialorder %v26, 0.0
    %v31 = vsel %vm27, 1, 0
    %v32 = vsel %vm28, 1, 0
    %v33 = vsel %vm29, 1, 0
    %v34 = vsel %vm30, 1, 0
    %v35 = vcvt.s32.f32 %v31
    %v36 = vcvt.s32.f32 %v32
    %v37 = vcvt.s32.f32 %v33
    %v38 = vcvt.s32.f32 %v34
    %39 = vst [vmem:[#allocation5] sm:$0xff] %v35
    %40 = vst [vmem:[#allocation5 + $0x8] sm:$0xff] %v36
    %41 = vst [vmem:[#allocation5 + $0x10] sm:$0xff] %v37
    %42 = vst [vmem:[#allocation5 + $0x18] sm:$0xff] %v38
    // Predicated region
    $region10: #{tpu_custom_call.1} parent=1 // pred_check
      _
    $region11: #{tpu_custom_call.1} parent=1 // pred_check_branch
      %44 = sbr.rel (0) target = $region13
    $region12: #{tpu_custom_call.1} parent=1 // pred_region
      %s46 = ssub.s32 512, 512
      %47 = vsyncadd [#allocation4], %s46
      %s48 = sshll.u32 [#allocation5], 4
      %s49 = int_to_ptr.vmem [resolvable:$true] %s48
      %54 = dma.vmem_to_hbm [thread:$0]  %s49, 512, %s1, [#allocation4], 256, 256, 16
    $region13: #{tpu_custom_call.1} parent=1 // pred_fallthru
      _
    // Predicated region
    $region14: #{tpu_custom_call.1} parent=1 // pred_check
      _
    $region15: #{tpu_custom_call.1} parent=1 // pred_check_branch
      %56 = sbr.rel (0) target = $region17
    $region16: #{tpu_custom_call.1} parent=1 // pred_region
      %57 = dma.done [#allocation4], 512
    $region17: #{tpu_custom_call.1} parent=1 // pred_fallthru
      _
    %58 = vsyncpa [#allocation3], 1
    %59 = vsyncpa [#allocation4], 1

</llo_original>
